<compile_context>
chip_gen: v5e
topology: v5e:2x2
jax: 0.10.0
libtpu: 0.0.40
codegen_flags: <defaults>
</compile_context>

<pallas_src>
import functools

import jax
import jax.numpy as jnp
from jax.experimental import pallas as pl
from jax.experimental.pallas import tpu as pltpu


def _round_up(x, m):
    return ((int(x) + m - 1) // m) * m


def _gce_kernel(logits_ref, targets_ref, out_ref, m_sc, d_sc, s_sc, *,
                q, n_true, c_true, tile_n, tile_c, mask_rows, mask_cols):
    i = pl.program_id(0)        # batch-tile index  ("parallel")
    j = pl.program_id(1)        # class-tile index  ("arbitrary", innermost)
    nc = pl.num_programs(1)

    @pl.when(j == 0)
    def _init():
        m_sc[...] = jnp.full(m_sc.shape, -jnp.inf, dtype=jnp.float32)
        d_sc[...] = jnp.zeros(d_sc.shape, dtype=jnp.float32)
        s_sc[...] = jnp.zeros(s_sc.shape, dtype=jnp.float32)

    x = logits_ref[...].astype(jnp.float32)    # (tile_n, tile_c)
    t = targets_ref[...].astype(jnp.float32)   # (tile_n, tile_c)

    if mask_cols:
        # Only compiled when C is not a multiple of tile_c: mask padded class
        # columns so they contribute exp(-inf)=0 to denom/num.
        col = j * tile_c + jax.lax.broadcasted_iota(jnp.int32, (tile_n, tile_c), 1)
        col_ok = col < c_true
        x = jnp.where(col_ok, x, -jnp.inf)
        t = jnp.where(col_ok, t, 0.0)

    # Online-softmax carry: never materializes the (N, C) softmax.
    m_new = jnp.maximum(m_sc[...], jnp.max(x, axis=1, keepdims=True))   # (tile_n, 1)
    alpha = jnp.exp(m_sc[...] - m_new)
    e = jnp.exp(x - m_new)                                              # (tile_n, tile_c)
    d_sc[...] = alpha * d_sc[...] + jnp.sum(e, axis=1, keepdims=True)
    s_sc[...] = alpha * s_sc[...] + jnp.sum(t * e, axis=1, keepdims=True)
    m_sc[...] = m_new

    @pl.when(j == nc - 1)
    def _finalize():
        pred_y = s_sc[...] / d_sc[...]          # == sum(targets * softmax(x), axis=1)
        pred_y = jnp.maximum(pred_y, jnp.float32(1e-4))
        loss = (1.0 - jnp.power(pred_y, jnp.float32(q))) / jnp.float32(q)   # (tile_n, 1)
        if mask_rows:
            # Only compiled when N is not a multiple of tile_n: drop OOB rows
            # (garbage logits can produce NaN there; where() discards it).
            row = i * tile_n + jax.lax.broadcasted_iota(jnp.int32, (tile_n, 1), 0)
            loss = jnp.where(row < n_true, loss, jnp.float32(0.0))
        partial = jnp.sum(loss)                 # scalar partial sum for this batch tile
        # Lane-dense (1, 8, 128) write; wrapper reads [:, 0, 0].
        out_ref[...] = jnp.full(out_ref.shape, partial, dtype=out_ref.dtype)


def gce_loss(outputs, targets, q=0.7, tile_n=None, tile_c=None,
             target_block_bytes=4 << 20):
    """Pallas GCE loss. outputs, targets: (N, C); q is a static Python float.

    Returns scalar f32 = mean((1 - clamp(sum(t * softmax(o), 1), 1e-4)**q) / q).
    Inputs may be f32 or bf16 (bf16 halves HBM traffic; exact for one-hot targets).
    """
    assert outputs.shape == targets.shape and outputs.ndim == 2
    n, c = outputs.shape
    q = float(q)

    it_o = jnp.dtype(outputs.dtype).itemsize
    it_t = jnp.dtype(targets.dtype).itemsize
    it_max = max(it_o, it_t)
    # bf16/fp16 rows pack 2-per-sublane: round batch tiles to 16 there.
    sub = 16 if min(it_o, it_t) == 2 else 8
    n_pad = _round_up(n, sub)

    def _lane(cc):                              # lane-padded class width in VMEM
        return max(_round_up(cc, 128), 128)

    # --- tile selection (dtype- and VMEM-budget-aware) -----------------------
    if tile_c is None:
        rows_full = (target_block_bytes // (_lane(c) * it_max)) // sub * sub
        if rows_full >= min(n_pad, 256):
            tile_c = c                                      # whole class dim per block
        else:                                               # vocab-scale C: tile classes
            tile_c = max(128, ((target_block_bytes // (256 * it_max)) // 128) * 128)
    tile_c = int(tile_c)
    if tile_c >= c:
        tile_c = c
    else:
        tile_c = max(128, (tile_c // 128) * 128)

    if tile_n is None:
        rows = (target_block_bytes // (_lane(tile_c) * it_max)) // sub * sub
        tile_n = max(sub, rows)
    tile_n = max(sub, _round_up(int(tile_n), sub))
    tile_n = min(tile_n, n_pad)

    grid = (pl.cdiv(n, tile_n), pl.cdiv(c, tile_c))
    num_row_tiles = grid[0]
    mask_rows = (n % tile_n) != 0
    mask_cols = (c % tile_c) != 0

    kernel = functools.partial(
        _gce_kernel, q=q, n_true=n, c_true=c, tile_n=tile_n, tile_c=tile_c,
        mask_rows=mask_rows, mask_cols=mask_cols)

    # VMEM budget: 2 pipeline buffers x both input blocks + scratch + output
    # blocks + an allowance for in-body f32 working tiles.
    block_in_bytes = tile_n * _lane(tile_c) * (it_o + it_t)
    needed = 2 * block_in_bytes
    needed += 3 * tile_n * 128 * 4              # (tile_n, 1) f32 scratch, lane-padded
    needed += 2 * 8 * 128 * 4                   # (1, 8, 128) output, double-buffered
    needed += 2 * tile_n * _lane(tile_c) * 4    # f32 working set inside the body
    vmem_limit = int(min(max(needed + (2 << 20), 16 << 20), 40 << 20))

    partials = pl.pallas_call(
        kernel,
        out_shape=jax.ShapeDtypeStruct((num_row_tiles, 8, 128), jnp.float32),
        grid=grid,
        in_specs=[
            pl.BlockSpec((tile_n, tile_c), lambda i, j: (i, j)),
            pl.BlockSpec((tile_n, tile_c), lambda i, j: (i, j)),
        ],
        out_specs=pl.BlockSpec((1, 8, 128), lambda i, j: (i, 0, 0)),
        scratch_shapes=[pltpu.VMEM((tile_n, 1), jnp.float32)] * 3,  # m, denom, num
        compiler_params=pltpu.CompilerParams(
            # Batch tiles are independent partial sums -> "parallel" (megacore on
            # v7x). The class axis carries the online-softmax state -> "arbitrary".
            dimension_semantics=("parallel", "arbitrary"),
            vmem_limit_bytes=vmem_limit,
        ),
    )(outputs, targets)

    # Final mean over per-tile partial sums (trivial (num_row_tiles,) reduction).
    return jnp.sum(partials[:, 0, 0]) / jnp.float32(n)


def _gce_ref(outputs, targets, q):
    pred = jax.nn.softmax(outputs.astype(jnp.float32), axis=1)
    pred_y = jnp.maximum(jnp.sum(targets.astype(jnp.float32) * pred, axis=1), 1e-4)
    return jnp.mean((1.0 - pred_y ** q) / q)


if __name__ == "__main__":
    key = jax.random.PRNGKey(0)
    k1, k2, k3, k4 = jax.random.split(key, 4)
    Q = 0.7

    # Case 1: f32 logits / one-hot targets, auto tiling (single block, grid (1,1)).
    N, C = 20, 16
    logits = jax.random.normal(k1, (N, C), dtype=jnp.float32)
    labels = jax.random.randint(k2, (N,), 0, C)
    targets = jax.nn.one_hot(labels, C, dtype=jnp.float32)
    ref = _gce_ref(logits, targets, Q)
    loss = jax.block_until_ready(gce_loss(logits, targets, q=Q))
    assert jnp.allclose(loss, ref, rtol=1e-5, atol=1e-6), (loss, ref)

    # Case 2: forced small batch tile -> multi-step "parallel" row axis, per-tile
    # partial outputs, masked ragged last tile (rows 20..23 are out of bounds).
    loss = jax.block_until_ready(gce_loss(logits, targets, q=Q, tile_n=8))
    assert jnp.allclose(loss, ref, rtol=1e-5, atol=1e-6), (loss, ref)

    # Case 3: bf16 logits + bf16 one-hot targets (half the HBM traffic; one-hot
    # targets are exact in bf16). Reference is computed on the same rounded inputs.
    logits_bf = logits.astype(jnp.bfloat16)
    targets_bf = targets.astype(jnp.bfloat16)
    ref_bf = _gce_ref(logits_bf, targets_bf, Q)
    loss = jax.block_until_ready(gce_loss(logits_bf, targets_bf, q=Q))
    assert jnp.allclose(loss, ref_bf, rtol=1e-5, atol=1e-6), (loss, ref_bf)

    # Case 4: class-tiled online softmax (C split across two lane tiles with a
    # ragged C tail + ragged N tail): grid (3, 2), carried m/denom/num scratch.
    N2, C2 = 20, 200
    logits2 = jax.random.normal(k3, (N2, C2), dtype=jnp.float32)
    labels2 = jax.random.randint(k4, (N2,), 0, C2)
    targets2 = jax.nn.one_hot(labels2, C2, dtype=jnp.float32)
    ref2 = _gce_ref(logits2, targets2, Q)
    loss2 = jax.block_until_ready(gce_loss(logits2, targets2, q=Q, tile_n=8, tile_c=128))
    assert jnp.allclose(loss2, ref2, rtol=1e-5, atol=1e-6), (loss2, ref2)

    print("KERNEL_OK")
</pallas_src>

<mosaic_0001>
module attributes {stable_mosaic.version = 11 : i64} {
  func.func @_gce_kernel(%arg0: i32, %arg1: i32, %arg2: memref<24x16xf32, #tpu.memory_space<vmem>>, %arg3: memref<24x16xf32, #tpu.memory_space<vmem>>, %arg4: memref<1x8x128xf32, #tpu.memory_space<vmem>>, %arg5: memref<24x1xf32, #tpu.memory_space<vmem>>, %arg6: memref<24x1xf32, #tpu.memory_space<vmem>>, %arg7: memref<24x1xf32, #tpu.memory_space<vmem>>) attributes {dimension_semantics = [#tpu.dimension_semantics<parallel>, #tpu.dimension_semantics<arbitrary>], iteration_bounds = array<i64: 1, 1>, scalar_prefetch = 0 : i64, scratch_operands = 3 : i64, tpu.core_type = #tpu.core_type<tc>, window_params = [{transform_indices = @transform_0, window_bounds = array<i64: 24, 16>}, {transform_indices = @transform_1, window_bounds = array<i64: 24, 16>}, {transform_indices = @transform_2, window_bounds = array<i64: 1, 8, 128>}]} {
    %c0_i32 = arith.constant 0 : i32
    %0 = arith.cmpi eq, %arg1, %c0_i32 : i32
    %1 = arith.extui %0 : i1 to i32
    %c0_i32_0 = arith.constant 0 : i32
    %2 = arith.cmpi ne, %1, %c0_i32_0 : i32
    scf.if %2 {
      %cst_22 = arith.constant 0xFF800000 : f32
      %32 = vector.broadcast %cst_22 : f32 to vector<24x1xf32>
      %c0_23 = arith.constant 0 : index
      %c0_24 = arith.constant 0 : index
      %33 = vector.load %arg5[%c0_23, %c0_24] : memref<24x1xf32, #tpu.memory_space<vmem>>, vector<24x1xf32>
      tpu.vector_store %arg5[%c0_23, %c0_24], %32 {strides = array<i32>} : memref<24x1xf32, #tpu.memory_space<vmem>>, vector<24x1xf32>,
      %cst_25 = arith.constant 0.000000e+00 : f32
      %34 = vector.broadcast %cst_25 : f32 to vector<24x1xf32>
      %c0_26 = arith.constant 0 : index
      %c0_27 = arith.constant 0 : index
      %35 = vector.load %arg6[%c0_26, %c0_27] : memref<24x1xf32, #tpu.memory_space<vmem>>, vector<24x1xf32>
      tpu.vector_store %arg6[%c0_26, %c0_27], %34 {strides = array<i32>} : memref<24x1xf32, #tpu.memory_space<vmem>>, vector<24x1xf32>,
      %cst_28 = arith.constant 0.000000e+00 : f32
      %36 = vector.broadcast %cst_28 : f32 to vector<24x1xf32>
      %c0_29 = arith.constant 0 : index
      %c0_30 = arith.constant 0 : index
      %37 = vector.load %arg7[%c0_29, %c0_30] : memref<24x1xf32, #tpu.memory_space<vmem>>, vector<24x1xf32>
      tpu.vector_store %arg7[%c0_29, %c0_30], %36 {strides = array<i32>} : memref<24x1xf32, #tpu.memory_space<vmem>>, vector<24x1xf32>,
    } else {
    }
    %c0 = arith.constant 0 : index
    %c0_1 = arith.constant 0 : index
    %3 = vector.load %arg2[%c0, %c0_1] : memref<24x16xf32, #tpu.memory_space<vmem>>, vector<24x16xf32>
    %c0_2 = arith.constant 0 : index
    %c0_3 = arith.constant 0 : index
    %4 = vector.load %arg3[%c0_2, %c0_3] : memref<24x16xf32, #tpu.memory_space<vmem>>, vector<24x16xf32>
    %c0_4 = arith.constant 0 : index
    %c0_5 = arith.constant 0 : index
    %5 = vector.load %arg5[%c0_4, %c0_5] : memref<24x1xf32, #tpu.memory_space<vmem>>, vector<24x1xf32>
    %cst = arith.constant dense<0xFF800000> : vector<24xf32>
    %6 = vector.multi_reduction <maximumf>, %3, %cst [1] : vector<24x16xf32> to vector<24xf32>
    %7 = vector.shape_cast %6 : vector<24xf32> to vector<24x1xf32>
    %8 = arith.maximumf %5, %7 : vector<24x1xf32>
    %c0_6 = arith.constant 0 : index
    %c0_7 = arith.constant 0 : index
    %9 = vector.load %arg5[%c0_6, %c0_7] : memref<24x1xf32, #tpu.memory_space<vmem>>, vector<24x1xf32>
    %10 = arith.subf %9, %8 : vector<24x1xf32>
    %11 = math.exp %10 : vector<24x1xf32>
    %12 = vector.broadcast %8 : vector<24x1xf32> to vector<24x16xf32>
    %13 = arith.subf %3, %12 : vector<24x16xf32>
    %14 = math.exp %13 : vector<24x16xf32>
    %c0_8 = arith.constant 0 : index
    %c0_9 = arith.constant 0 : index
    %15 = vector.load %arg6[%c0_8, %c0_9] : memref<24x1xf32, #tpu.memory_space<vmem>>, vector<24x1xf32>
    %16 = arith.mulf %11, %15 : vector<24x1xf32>
    %cst_10 = arith.constant dense<0.000000e+00> : vector<24xf32>
    %17 = vector.multi_reduction <add>, %14, %cst_10 [1] : vector<24x16xf32> to vector<24xf32>
    %18 = vector.shape_cast %17 : vector<24xf32> to vector<24x1xf32>
    %19 = arith.addf %16, %18 : vector<24x1xf32>
    %c0_11 = arith.constant 0 : index
    %c0_12 = arith.constant 0 : index
    %20 = vector.load %arg6[%c0_11, %c0_12] : memref<24x1xf32, #tpu.memory_space<vmem>>, vector<24x1xf32>
    tpu.vector_store %arg6[%c0_11, %c0_12], %19 {strides = array<i32>} : memref<24x1xf32, #tpu.memory_space<vmem>>, vector<24x1xf32>,
    %c0_13 = arith.constant 0 : index
    %c0_14 = arith.constant 0 : index
    %21 = vector.load %arg7[%c0_13, %c0_14] : memref<24x1xf32, #tpu.memory_space<vmem>>, vector<24x1xf32>
    %22 = arith.mulf %11, %21 : vector<24x1xf32>
    %23 = arith.mulf %4, %14 : vector<24x16xf32>
    %cst_15 = arith.constant dense<0.000000e+00> : vector<24xf32>
    %24 = vector.multi_reduction <add>, %23, %cst_15 [1] : vector<24x16xf32> to vector<24xf32>
    %25 = vector.shape_cast %24 : vector<24xf32> to vector<24x1xf32>
    %26 = arith.addf %22, %25 : vector<24x1xf32>
    %c0_16 = arith.constant 0 : index
    %c0_17 = arith.constant 0 : index
    %27 = vector.load %arg7[%c0_16, %c0_17] : memref<24x1xf32, #tpu.memory_space<vmem>>, vector<24x1xf32>
    tpu.vector_store %arg7[%c0_16, %c0_17], %26 {strides = array<i32>} : memref<24x1xf32, #tpu.memory_space<vmem>>, vector<24x1xf32>,
    %c0_18 = arith.constant 0 : index
    %c0_19 = arith.constant 0 : index
    %28 = vector.load %arg5[%c0_18, %c0_19] : memref<24x1xf32, #tpu.memory_space<vmem>>, vector<24x1xf32>
    tpu.vector_store %arg5[%c0_18, %c0_19], %8 {strides = array<i32>} : memref<24x1xf32, #tpu.memory_space<vmem>>, vector<24x1xf32>,
    %c0_i32_20 = arith.constant 0 : i32
    %29 = arith.cmpi eq, %arg1, %c0_i32_20 : i32
    %30 = arith.extui %29 : i1 to i32
    %c0_i32_21 = arith.constant 0 : i32
    %31 = arith.cmpi ne, %30, %c0_i32_21 : i32
    scf.if %31 {
      %c0_22 = arith.constant 0 : index
      %c0_23 = arith.constant 0 : index
      %32 = vector.load %arg7[%c0_22, %c0_23] : memref<24x1xf32, #tpu.memory_space<vmem>>, vector<24x1xf32>
      %c0_24 = arith.constant 0 : index
      %c0_25 = arith.constant 0 : index
      %33 = vector.load %arg6[%c0_24, %c0_25] : memref<24x1xf32, #tpu.memory_space<vmem>>, vector<24x1xf32>
      %34 = arith.divf %32, %33 : vector<24x1xf32>
      %cst_26 = arith.constant 9.99999974E-5 : f32
      %35 = vector.broadcast %cst_26 : f32 to vector<24x1xf32>
      %36 = arith.maximumf %34, %35 : vector<24x1xf32>
      %cst_27 = arith.constant 0.699999988 : f32
      %37 = vector.broadcast %cst_27 : f32 to vector<24x1xf32>
      %38 = math.powf %36, %37 : vector<24x1xf32>
      %cst_28 = arith.constant 1.000000e+00 : f32
      %39 = vector.broadcast %cst_28 : f32 to vector<24x1xf32>
      %40 = arith.subf %39, %38 : vector<24x1xf32>
      %cst_29 = arith.constant 0.699999988 : f32
      %41 = vector.broadcast %cst_29 : f32 to vector<24x1xf32>
      %42 = arith.divf %40, %41 : vector<24x1xf32>
      %c24_i32 = arith.constant 24 : i32
      %43 = arith.muli %arg0, %c24_i32 : i32
      %44 = tpu.iota {dimensions = array<i32: 0>} : vector<24x1xi32>
      %45 = vector.broadcast %43 : i32 to vector<24x1xi32>
      %46 = arith.addi %45, %44 : vector<24x1xi32>
      %c20_i32 = arith.constant 20 : i32
      %47 = vector.broadcast %c20_i32 : i32 to vector<24x1xi32>
      %48 = arith.cmpi slt, %46, %47 : vector<24x1xi32>
      %cst_30 = arith.constant 0.000000e+00 : f32
      %49 = vector.broadcast %cst_30 : f32 to vector<24x1xf32>
      %50 = arith.select %48, %42, %49 : vector<24x1xi1>, vector<24x1xf32>
      %51 = vector.shape_cast %50 : vector<24x1xf32> to vector<1x24x1xf32>
      %cst_31 = arith.constant dense<0.000000e+00> : vector<1xf32>
      %52 = vector.multi_reduction <add>, %51, %cst_31 [1, 2] : vector<1x24x1xf32> to vector<1xf32>
      %53 = vector.shape_cast %52 : vector<1xf32> to vector<1x1x1xf32>
      %54 = vector.extract %53[0, 0, 0] : f32 from vector<1x1x1xf32>
      %55 = vector.broadcast %54 : f32 to vector<1x8x128xf32>
      %c0_32 = arith.constant 0 : index
      %c0_33 = arith.constant 0 : index
      %c0_34 = arith.constant 0 : index
      %56 = vector.load %arg4[%c0_32, %c0_33, %c0_34] : memref<1x8x128xf32, #tpu.memory_space<vmem>>, vector<1x8x128xf32>
      tpu.vector_store %arg4[%c0_32, %c0_33, %c0_34], %55 {strides = array<i32>} : memref<1x8x128xf32, #tpu.memory_space<vmem>>, vector<1x8x128xf32>,
    } else {
    }
    return
  }
  func.func @transform_0(%arg0: i32, %arg1: i32) -> (i32, i32) {
    %c0_i32 = arith.constant 0 : i32
    return %arg0, %arg1 : i32, i32
  }
  func.func @transform_1(%arg0: i32, %arg1: i32) -> (i32, i32) {
    %c0_i32 = arith.constant 0 : i32
    return %arg0, %arg1 : i32, i32
  }
  func.func @transform_2(%arg0: i32, %arg1: i32) -> (i32, i32, i32) {
    %c0_i32 = arith.constant 0 : i32
    %c0_i32_0 = arith.constant 0 : i32
    %c0_i32_1 = arith.constant 0 : i32
    return %arg0, %c0_i32, %c0_i32_0 : i32, i32, i32
  }
}

</mosaic_0001>

<llo_original>
// kernel: tpu_custom_call.1
$region0: #{tpu_custom_call.1}
  #allocation0 [shape = 'u32[]', space=smem, size = 0x4, offset = 0x4, fixed_abs, tag = 'smem constant byte address 0x4 - core index']
  #allocation1 [shape = 'u32[72,128]{1,0:T(1,128)}', space=vmem, size = 0x9000, scoped, tag = 'internal scratch']
  #allocation2 [shape = 'f32[24,1]{1,0:T(8,128)}', space=vmem, size = 0x3000, scoped, tag = 'scratch operand']
  #allocation3 [shape = 'f32[24,1]{1,0:T(8,128)}', space=vmem, size = 0x3000, scoped, tag = 'scratch operand']
  #allocation4 [shape = 'f32[24,1]{1,0:T(8,128)}', space=vmem, size = 0x3000, scoped, tag = 'scratch operand']
  %s0 = inlined_call_operand.vmem [shape: f32[20,16], index: 0, kind: input, shape index: {}]
  %s1 = inlined_call_operand.vmem [shape: f32[20,16], index: 1, kind: input, shape index: {}]
  %s2 = inlined_call_operand.hbm [shape: f32[1,8,128], index: 2, kind: output, shape index: {}]
  %s3 = sld [smem:[#allocation0]]
  $region26: #{tpu_custom_call.1} parent=0
    _
  %s5 = ssub.s32 1, %s3
  %s6 = scalar_select 0, %s5, %s3
  $region1: #{tpu_custom_call.1} parent=0
    #allocation5 [shape = 'u8[4096]{0}', space=vmem, size = 0x1000, scoped, tag = 'output window, operand 0, single buffered']
    #allocation6 [shape = 's32[1]{0}', space=sflag, size = 0x4, scoped, tag = 'scoped memory for tpu_custom_call.1']
    %7 = vsyncpa [#allocation6], 0
    // Predicated region
    $region2: #{tpu_custom_call.1} parent=1 // pred_check
      _
    $region3: #{tpu_custom_call.1} parent=1 // pred_check_branch
      %9 = sbr.rel (0) target = $region5
    $region4: #{tpu_custom_call.1} parent=1 // pred_region
      _
    $region5: #{tpu_custom_call.1} parent=1 // pred_fallthru
      _
    // Predicated region
    $region6: #{tpu_custom_call.1} parent=1 // pred_check
      _
    $region7: #{tpu_custom_call.1} parent=1 // pred_check_branch
      %11 = sbr.rel (0) target = $region9
    $region8: #{tpu_custom_call.1} parent=1 // pred_region
      _
    $region9: #{tpu_custom_call.1} parent=1 // pred_fallthru
      _
    %p12 = scmp.eq.s32.totalorder 0, 0
    // Predicated region
    $region10: #{tpu_custom_call.1} parent=1 // pred_check
      %p13 = pneg %p12
    $region11: #{tpu_custom_call.1} parent=1 // pred_check_branch
      %15 = sbr.rel (%p13) target = $region13
    $region12: #{tpu_custom_call.1} parent=1 // pred_region
      %vm16 = vcmask 7168
      %17 = vst.msk [vmem:[#allocation2] sm:$0xff] %vm16, -inf
      %18 = vst.msk [vmem:[#allocation2 + $0x8] sm:$0xff] %vm16, -inf
      %19 = vst.msk [vmem:[#allocation2 + $0x10] sm:$0xff] %vm16, -inf
      %20 = vst.msk [vmem:[#allocation3] sm:$0xff] %vm16, 0.0
      %21 = vst.msk [vmem:[#allocation3 + $0x8] sm:$0xff] %vm16, 0.0
      %22 = vst.msk [vmem:[#allocation3 + $0x10] sm:$0xff] %vm16, 0.0
      %23 = vst.msk [vmem:[#allocation4] sm:$0xff] %vm16, 0.0
      %24 = vst.msk [vmem:[#allocation4 + $0x8] sm:$0xff] %vm16, 0.0
      %25 = vst.msk [vmem:[#allocation4 + $0x10] sm:$0xff] %vm16, 0.0
    $region13: #{tpu_custom_call.1} parent=1 // pred_fallthru
      _
    %v26 = vld [vmem:[%s0] sm:$0xff]
    %v27 = vld [vmem:[%s0 + $0x8] sm:$0xff]
    %v28 = vld [vmem:[%s0 + $0x10] sm:$0xff]
    %v29 = vld [vmem:[%s1] sm:$0xff]
    %v30 = vld [vmem:[%s1 + $0x8] sm:$0xff]
    %v31 = vld [vmem:[%s1 + $0x10] sm:$0xff]
    %v32 = vld [vmem:[#allocation2] sm:$0xff]
    %v33 = vld [vmem:[#allocation2 + $0x8] sm:$0xff]
    %v34 = vld [vmem:[#allocation2 + $0x10] sm:$0xff]
    %vm35 = vcmask 130048
    %v36 = vsel %vm35, %v26, -inf
    %37 = vmax.xlane.f32.xlu0 %v36
    %v38 = vpop.xlane.xlu0 %37
    %v39 = vsel %vm35, %v27, -inf
    %40 = vmax.xlane.f32.xlu0 %v39
    %v41 = vpop.xlane.xlu0 %40
    %v42 = vsel %vm35, %v28, -inf
    %43 = vmax.xlane.f32.xlu0 %v42
    %v44 = vpop.xlane.xlu0 %43
    %v45 = vmax.f32 %v32, %v38
    %v46 = vmax.f32 %v33, %v41
    %v47 = vmax.f32 %v34, %v44
    %v48 = vsub.f32 %v32, %v45
    %v49 = vsub.f32 %v33, %v46
    %v50 = vsub.f32 %v34, %v47
    %v51 = vmul.f32 %v48, 1.442695
    %v52 = vpow.pop %v51
    %v53 = vmul.f32 %v49, 1.442695
    %v54 = vpow.pop %v53
    %v55 = vmul.f32 %v50, 1.442695
    %v56 = vpow.pop %v55
    %58 = vset.pattern.permute.xlu0 0
    %59 = vperm.xlu0 %58, %v45
    %v60 = vpop.permute.xlu0 %59
    %63 = vset.pattern.permute.xlu0 0
    %64 = vperm.xlu0 %63, %v46
    %v65 = vpop.permute.xlu0 %64
    %68 = vset.pattern.permute.xlu0 0
    %69 = vperm.xlu0 %68, %v47
    %v70 = vpop.permute.xlu0 %69
    %v72 = vsub.f32 %v26, %v60
    %v73 = vsub.f32 %v27, %v65
    %v74 = vsub.f32 %v28, %v70
    %v75 = vmul.f32 %v72, 1.442695
    %v76 = vpow.pop %v75
    %v77 = vmul.f32 %v73, 1.442695
    %v78 = vpow.pop %v77
    %v79 = vmul.f32 %v74, 1.442695
    %v80 = vpow.pop %v79
    %v81 = vld [vmem:[#allocation3] sm:$0xff]
    %v82 = vld [vmem:[#allocation3 + $0x8] sm:$0xff]
    %v83 = vld [vmem:[#allocation3 + $0x10] sm:$0xff]
    %v84 = vmul.f32 %v52, %v81
    %v85 = vmul.f32 %v54, %v82
    %v86 = vmul.f32 %v56, %v83
    %v87 = vsel %vm35, %v76, 0.0
    %88 = vadd.xlane.f32.xlu0 %v87
    %v89 = vpop.xlane.xlu0 %88
    %v90 = vsel %vm35, %v78, 0.0
    %91 = vadd.xlane.f32.xlu0 %v90
    %v92 = vpop.xlane.xlu0 %91
    %v93 = vsel %vm35, %v80, 0.0
    %94 = vadd.xlane.f32.xlu0 %v93
    %v95 = vpop.xlane.xlu0 %94
    %v96 = vadd.f32 %v84, %v89
    %v97 = vadd.f32 %v85, %v92
    %v98 = vadd.f32 %v86, %v95
    %vm99 = vcmask 7168
    %100 = vst.msk [vmem:[#allocation3] sm:$0xff] %vm99, %v96
    %101 = vst.msk [vmem:[#allocation3 + $0x8] sm:$0xff] %vm99, %v97
    %102 = vst.msk [vmem:[#allocation3 + $0x10] sm:$0xff] %vm99, %v98
    %v103 = vld [vmem:[#allocation4] sm:$0xff]
    %v104 = vld [vmem:[#allocation4 + $0x8] sm:$0xff]
    %v105 = vld [vmem:[#allocation4 + $0x10] sm:$0xff]
    %v106 = vmul.f32 %v52, %v103
    %v107 = vmul.f32 %v54, %v104
    %v108 = vmul.f32 %v56, %v105
    %v109 = vmul.f32 %v29, %v76
    %v110 = vmul.f32 %v30, %v78
    %v111 = vmul.f32 %v31, %v80
    %v112 = vsel %vm35, %v109, 0.0
    %113 = vadd.xlane.f32.xlu0 %v112
    %v114 = vpop.xlane.xlu0 %113
    %v115 = vsel %vm35, %v110, 0.0
    %116 = vadd.xlane.f32.xlu0 %v115
    %v117 = vpop.xlane.xlu0 %116
    %v118 = vsel %vm35, %v111, 0.0
    %119 = vadd.xlane.f32.xlu0 %v118
    %v120 = vpop.xlane.xlu0 %119
    %v121 = vadd.f32 %v106, %v114
    %v122 = vadd.f32 %v107, %v117
    %v123 = vadd.f32 %v108, %v120
    %124 = vst.msk [vmem:[#allocation4] sm:$0xff] %vm99, %v121
    %125 = vst.msk [vmem:[#allocation4 + $0x8] sm:$0xff] %vm99, %v122
    %126 = vst.msk [vmem:[#allocation4 + $0x10] sm:$0xff] %vm99, %v123
    %127 = vst.msk [vmem:[#allocation2] sm:$0xff] %vm99, %v45
    %128 = vst.msk [vmem:[#allocation2 + $0x8] sm:$0xff] %vm99, %v46
    %129 = vst.msk [vmem:[#allocation2 + $0x10] sm:$0xff] %vm99, %v47
    // Predicated region
    $region14: #{tpu_custom_call.1} parent=1 // pred_check
      %p130 = pneg %p12
    $region15: #{tpu_custom_call.1} parent=1 // pred_check_branch
      %132 = sbr.rel (%p130) target = $region17
    $region16: #{tpu_custom_call.1} parent=1 // pred_region
      %v133 = vld [vmem:[#allocation4] sm:$0xff]
      %v134 = vld [vmem:[#allocation4 + $0x8] sm:$0xff]
      %v135 = vld [vmem:[#allocation4 + $0x10] sm:$0xff]
      %v136 = vld [vmem:[#allocation3] sm:$0xff]
      %v137 = vld [vmem:[#allocation3 + $0x8] sm:$0xff]
      %v138 = vld [vmem:[#allocation3 + $0x10] sm:$0xff]
      %v139 = vrcp.pop %v136
      %v140 = vmul.f32 %v136, %v139
      %v141 = vsub.f32 1.0, %v140
      %v142 = vmul.f32 %v139, %v141
      %v143 = vadd.f32 %v139, %v142
      %vm144 = vweird.f32 %v136
      %vm145 = vweird.f32 %v139
      %vm146 = vmor %vm144, %vm145
      %v147 = vsel %vm146, %v139, %v143
      %v148 = vand.u32 2147483647, %v136
      %vm149 = vcmp.eq.f32.partialorder %v148, 8.507059e+37
      %v150 = vand.u32 %v136, 2147483648
      %v151 = vor.u32 1.1754944e-38, %v150
      %v152 = vsel %vm149, %v151, %v147
      %v153 = vmul.f32 %v133, %v152
      %v154 = vrcp.pop %v137
      %v155 = vmul.f32 %v137, %v154
      %v156 = vsub.f32 1.0, %v155
      %v157 = vmul.f32 %v154, %v156
      %v158 = vadd.f32 %v154, %v157
      %vm159 = vweird.f32 %v137
      %vm160 = vweird.f32 %v154
      %vm161 = vmor %vm159, %vm160
      %v162 = vsel %vm161, %v154, %v158
      %v163 = vand.u32 2147483647, %v137
      %vm164 = vcmp.eq.f32.partialorder %v163, 8.507059e+37
      %v165 = vand.u32 %v137, 2147483648
      %v166 = vor.u32 1.1754944e-38, %v165
      %v167 = vsel %vm164, %v166, %v162
      %v168 = vmul.f32 %v134, %v167
      %v169 = vrcp.pop %v138
      %v170 = vmul.f32 %v138, %v169
      %v171 = vsub.f32 1.0, %v170
      %v172 = vmul.f32 %v169, %v171
      %v173 = vadd.f32 %v169, %v172
      %vm174 = vweird.f32 %v138
      %vm175 = vweird.f32 %v169
      %vm176 = vmor %vm174, %vm175
      %v177 = vsel %vm176, %v169, %v173
      %v178 = vand.u32 2147483647, %v138
      %vm179 = vcmp.eq.f32.partialorder %v178, 8.507059e+37
      %v180 = vand.u32 %v138, 2147483648
      %v181 = vor.u32 1.1754944e-38, %v180
      %v182 = vsel %vm179, %v181, %v177
      %v183 = vmul.f32 %v135, %v182
      %v184 = vmax.f32 %v153, 0.0001
      %v185 = vmax.f32 %v168, 0.0001
      %v186 = vmax.f32 %v183, 0.0001
      %v187 = vpow.f32 %v184, 0.7
      %v188 = vpow.f32 %v185, 0.7
      %v189 = vpow.f32 %v186, 0.7
      %v190 = vsub.f32 1.0, %v187
      %v191 = vsub.f32 1.0, %v188
      %v192 = vsub.f32 1.0, %v189
      %v193 = vrcp.pop 0.7
      %v194 = vmul.f32 0.7, %v193
      %v195 = vsub.f32 1.0, %v194
      %v196 = vmul.f32 %v193, %v195
      %v197 = vadd.f32 %v193, %v196
      %vm198 = vweird.f32 %v193
      %v199 = vsel %vm198, %v193, %v197
      %v200 = vmul.f32 %v190, %v199
      %v201 = vmul.f32 %v191, %v199
      %v202 = vmul.f32 %v192, %v199
      %s203 = smul.u32 0, 24
      %v204 = vlaneseq
      %v205 = vshrl.u32 %v204, 7
      %v206 = vadd.s32 %v205, 8
      %v207 = vadd.s32 %v205, 16
      %v208 = vstv %s203
      %v209 = vadd.s32 %v208, %v205
      %v210 = vadd.s32 %v208, %v206
      %v211 = vadd.s32 %v208, %v207
      %vm212 = vcmp.lt.s32.totalorder %v209, 20
      %vm213 = vcmp.lt.s32.totalorder %v210, 20
      %vm214 = vcmp.lt.s32.totalorder %v211, 20
      %v215 = vsel %vm212, %v200, 0.0
      %v216 = vsel %vm213, %v201, 0.0
      %v217 = vsel %vm214, %v202, 0.0
      %v218 = vsel %vm99, %v215, 0.0
      %v219 = vsel %vm99, %v216, 0.0
      %v220 = vadd.f32 %v218, %v219
      %v221 = vsel %vm99, %v217, 0.0
      %v222 = vadd.f32 %v220, %v221
      %223 = vadd.xlane.f32.xlu0 %v222
      %v224 = vpop.xlane.xlu0 %223
      %v225 = vrot.slane %v224, 4
      %v226 = vadd.f32 %v224, %v225
      %v227 = vrot.slane %v226, 2
      %v228 = vadd.f32 %v226, %v227
      %v229 = vrot.slane %v228, 1
      %v230 = vadd.f32 %v228, %v229
      %s231 = vtos %v230
      %v232 = vstv %s231
      %233 = vst [vmem:[#allocation5] sm:$0xff] %v232
    $region17: #{tpu_custom_call.1} parent=1 // pred_fallthru
      _
    // Predicated region
    $region18: #{tpu_custom_call.1} parent=1 // pred_check
      _
    $region19: #{tpu_custom_call.1} parent=1 // pred_check_branch
      %235 = sbr.rel (0) target = $region21
    $region20: #{tpu_custom_call.1} parent=1 // pred_region
      %237 = vsyncadd [#allocation6], 0
      %s239 = sshll.u32 [#allocation5], 4
      %s240 = int_to_ptr.vmem [resolvable:$true] %s239
      %s241 = sshll.u32 %s2, 4
      %s242 = int_to_ptr.hbm [resolvable:$true] %s241
      %244 = dma.vmem_to_hbm [thread:$0]  %s240, 128, %s242, [#allocation6]
    $region21: #{tpu_custom_call.1} parent=1 // pred_fallthru
      _
    // Predicated region
    $region22: #{tpu_custom_call.1} parent=1 // pred_check
      _
    $region23: #{tpu_custom_call.1} parent=1 // pred_check_branch
      %246 = sbr.rel (0) target = $region25
    $region24: #{tpu_custom_call.1} parent=1 // pred_region
      %248 = dma.done [#allocation6], 128
    $region25: #{tpu_custom_call.1} parent=1 // pred_fallthru
      _
    %249 = vsyncpa [#allocation6], 1

</llo_original>
